<compile_context>
chip_gen: v5e
topology: v5e:2x2
jax: 0.10.0
libtpu: 0.0.40
codegen_flags: <defaults>
</compile_context>

<pallas_src>
import functools

import jax
import jax.numpy as jnp
from jax.experimental import pallas as pl
from jax.experimental.pallas import tpu as pltpu


_VMEM_LIMIT_BYTES = 32 * 1024 * 1024      # safe scoped limit on v5e/v6e/v7x
_BLOCK_BYTES_BUDGET = 4 * 1024 * 1024     # per block; x4 for double-buffered in+out


def _round_up(v, m):
    return (v + m - 1) // m * m


def _choose_batch_tile(n, bytes_per_batch):
    """Largest divisor of n that fits the per-block VMEM budget, keeping >=2 steps."""
    max_b = max(1, _BLOCK_BYTES_BUDGET // max(1, bytes_per_batch))
    b = 1
    for d in range(1, n + 1):
        if n % d == 0 and d <= max_b:
            b = d
    # Keep at least 2 grid steps when possible (v7x has 2 TensorCores).
    if b == n and n > 1:
        for d in range(n - 1, 0, -1):
            if n % d == 0:
                b = d
                break
    return b


def se_kernel(x_ref, w1t_ref, b1_ref, w2t_ref, b2_ref, o_ref, *, inv_hw):
    # x_ref: (B_tile, C, HW_pad) slab in its native dtype.
    x = x_ref[...]

    # Squeeze: spatial sum accumulated in f32; padded lanes are zeros, so
    # dividing by the true H*W gives the exact mean.
    pooled = jnp.sum(x, axis=-1, dtype=jnp.float32) * inv_hw          # (B, C)

    # Excitation (tiny compute, batched over B_tile rows):
    #   fc1 (1x1 conv) + ReLU, fc2 (1x1 conv) + sigmoid.
    h = jnp.dot(pooled, w1t_ref[...],
                preferred_element_type=jnp.float32) + b1_ref[...]     # (B, C_r)
    h = jnp.maximum(h, 0.0)
    s = jnp.dot(h, w2t_ref[...],
                preferred_element_type=jnp.float32) + b2_ref[...]     # (B, C)
    s = jax.nn.sigmoid(s)

    # Scale: per-channel gate broadcast over spatial lanes, in native dtype.
    o_ref[...] = x * s.astype(x.dtype)[:, :, None]


@jax.jit
def se_module(x, w1, b1, w2, b2):
    """x: (N, C, H, W); w1: (C_r, C); b1: (C_r, 1); w2: (C, C_r); b2: (C, 1)."""
    N, C, H, W = x.shape
    C_r = w1.shape[0]
    HW = H * W
    HW_pad = _round_up(HW, 128)

    x_flat = x.reshape(N, C, HW)
    if HW_pad != HW:
        # Zero padding keeps the pooled mean exact (divide by true HW) and the
        # output store lane-dense; padded lanes are sliced off afterwards.
        x_flat = jnp.pad(x_flat, ((0, 0), (0, 0), (0, HW_pad - HW)))

    bytes_per_batch = C * HW_pad * jnp.dtype(x.dtype).itemsize
    B_tile = _choose_batch_tile(N, bytes_per_batch)
    grid = (N // B_tile,)

    # Pre-transpose weights (so in-kernel dots are plain row-major matmuls)
    # and make biases lane-dense rows.
    w1_t = w1.T.astype(jnp.float32)          # (C, C_r)
    w2_t = w2.T.astype(jnp.float32)          # (C_r, C)
    b1_row = b1.reshape(1, C_r).astype(jnp.float32)
    b2_row = b2.reshape(1, C).astype(jnp.float32)

    kernel = functools.partial(se_kernel, inv_hw=1.0 / HW)

    out_flat = pl.pallas_call(
        kernel,
        out_shape=jax.ShapeDtypeStruct((N, C, HW_pad), x.dtype),
        grid_spec=pltpu.PrefetchScalarGridSpec(
            num_scalar_prefetch=0,
            grid=grid,
            in_specs=[
                pl.BlockSpec((B_tile, C, HW_pad), lambda n: (n, 0, 0)),
                pl.BlockSpec((C, C_r), lambda n: (0, 0)),
                pl.BlockSpec((1, C_r), lambda n: (0, 0)),
                pl.BlockSpec((C_r, C), lambda n: (0, 0)),
                pl.BlockSpec((1, C), lambda n: (0, 0)),
            ],
            out_specs=pl.BlockSpec((B_tile, C, HW_pad), lambda n: (n, 0, 0)),
        ),
        compiler_params=pltpu.CompilerParams(
            dimension_semantics=("parallel",),
            vmem_limit_bytes=_VMEM_LIMIT_BYTES,
        ),
    )(x_flat, w1_t, b1_row, w2_t, b2_row)

    if HW_pad != HW:
        out_flat = out_flat[:, :, :HW]
    return out_flat.reshape(N, C, H, W)


def se_reference(x, w1, b1, w2, b2):
    # Pure-JAX reference mirroring the PyTorch forward.
    pooled = jnp.mean(x, axis=(2, 3))                       # (N, C)
    h = jnp.maximum(pooled @ w1.T + b1[:, 0], 0.0)          # (N, C_r)
    s = jax.nn.sigmoid(h @ w2.T + b2[:, 0])                 # (N, C)
    return x * s[:, :, None, None]


if __name__ == "__main__":
    # Small shapes consistent with the module: batch=2, channels=16,
    # reduction=4, spatial=16x16.
    N, C, H, W = 2, 16, 16, 16
    reduction = 4
    C_r = C // reduction

    key = jax.random.PRNGKey(0)
    kx, kw1, kb1, kw2, kb2 = jax.random.split(key, 5)

    x = jax.random.normal(kx, (N, C, H, W), dtype=jnp.float32)
    # Deterministic synthetic parameters (Conv2d 1x1 weights squeezed to 2D).
    w1 = jax.random.normal(kw1, (C_r, C), dtype=jnp.float32) * 0.1
    b1 = jax.random.normal(kb1, (C_r, 1), dtype=jnp.float32) * 0.1
    w2 = jax.random.normal(kw2, (C, C_r), dtype=jnp.float32) * 0.1
    b2 = jax.random.normal(kb2, (C, 1), dtype=jnp.float32) * 0.1

    out = se_module(x, w1, b1, w2, b2)
    out = jax.block_until_ready(out)

    ref = se_reference(x, w1, b1, w2, b2)
    assert out.shape == (N, C, H, W)
    assert jnp.allclose(out, ref, atol=1e-5, rtol=1e-5), "mismatch vs reference"

    print("KERNEL_OK")
</pallas_src>

<mosaic_0001>
module attributes {stable_mosaic.version = 11 : i64} {
  func.func @se_kernel(%arg0: i32, %arg1: memref<1x16x256xf32, #tpu.memory_space<vmem>>, %arg2: memref<16x4xf32, #tpu.memory_space<vmem>>, %arg3: memref<1x4xf32, #tpu.memory_space<vmem>>, %arg4: memref<4x16xf32, #tpu.memory_space<vmem>>, %arg5: memref<1x16xf32, #tpu.memory_space<vmem>>, %arg6: memref<1x16x256xf32, #tpu.memory_space<vmem>>) attributes {dimension_semantics = [#tpu.dimension_semantics<parallel>], iteration_bounds = array<i64: 2>, scalar_prefetch = 0 : i64, scratch_operands = 0 : i64, tpu.core_type = #tpu.core_type<tc>, window_params = [{transform_indices = @transform_0, window_bounds = array<i64: 1, 16, 256>}, {pipeline_mode = #tpu.pipeline_mode<synchronous>, transform_indices = @transform_1, window_bounds = array<i64: 16, 4>}, {pipeline_mode = #tpu.pipeline_mode<synchronous>, transform_indices = @transform_2, window_bounds = array<i64: 1, 4>}, {pipeline_mode = #tpu.pipeline_mode<synchronous>, transform_indices = @transform_3, window_bounds = array<i64: 4, 16>}, {pipeline_mode = #tpu.pipeline_mode<synchronous>, transform_indices = @transform_4, window_bounds = array<i64: 1, 16>}, {transform_indices = @transform_5, window_bounds = array<i64: 1, 16, 256>}]} {
    %c0 = arith.constant 0 : index
    %c0_0 = arith.constant 0 : index
    %c0_1 = arith.constant 0 : index
    %0 = vector.load %arg1[%c0, %c0_0, %c0_1] : memref<1x16x256xf32, #tpu.memory_space<vmem>>, vector<1x16x256xf32>
    %cst = arith.constant dense<0.000000e+00> : vector<1x16xf32>
    %1 = vector.multi_reduction <add>, %0, %cst [2] : vector<1x16x256xf32> to vector<1x16xf32>
    %cst_2 = arith.constant 3.906250e-03 : f32
    %2 = vector.broadcast %cst_2 : f32 to vector<1x16xf32>
    %3 = arith.mulf %1, %2 : vector<1x16xf32>
    %c0_3 = arith.constant 0 : index
    %c0_4 = arith.constant 0 : index
    %4 = vector.load %arg2[%c0_3, %c0_4] : memref<16x4xf32, #tpu.memory_space<vmem>>, vector<16x4xf32>
    %cst_5 = arith.constant dense<0.000000e+00> : vector<1x4xf32>
    %5 = tpu.matmul %3, %4, %cst_5 {dimension_numbers = #tpu.dot_dimension_numbers<[1], [0], [0], [1], [0, 0, 1, 1], [], []>} : vector<1x16xf32>, vector<16x4xf32>, vector<1x4xf32> -> vector<1x4xf32>
    %c0_6 = arith.constant 0 : index
    %c0_7 = arith.constant 0 : index
    %6 = vector.load %arg3[%c0_6, %c0_7] : memref<1x4xf32, #tpu.memory_space<vmem>>, vector<1x4xf32>
    %7 = arith.addf %5, %6 : vector<1x4xf32>
    %cst_8 = arith.constant 0.000000e+00 : f32
    %8 = vector.broadcast %cst_8 : f32 to vector<1x4xf32>
    %9 = arith.maximumf %7, %8 : vector<1x4xf32>
    %c0_9 = arith.constant 0 : index
    %c0_10 = arith.constant 0 : index
    %10 = vector.load %arg4[%c0_9, %c0_10] : memref<4x16xf32, #tpu.memory_space<vmem>>, vector<4x16xf32>
    %cst_11 = arith.constant dense<0.000000e+00> : vector<1x16xf32>
    %11 = tpu.matmul %9, %10, %cst_11 {dimension_numbers = #tpu.dot_dimension_numbers<[1], [0], [0], [1], [0, 0, 1, 1], [], []>} : vector<1x4xf32>, vector<4x16xf32>, vector<1x16xf32> -> vector<1x16xf32>
    %c0_12 = arith.constant 0 : index
    %c0_13 = arith.constant 0 : index
    %12 = vector.load %arg5[%c0_12, %c0_13] : memref<1x16xf32, #tpu.memory_space<vmem>>, vector<1x16xf32>
    %13 = arith.addf %11, %12 : vector<1x16xf32>
    %14 = arith.negf %13 : vector<1x16xf32>
    %15 = math.exp %14 : vector<1x16xf32>
    %cst_14 = arith.constant 1.000000e+00 : f32
    %16 = vector.broadcast %cst_14 : f32 to vector<1x16xf32>
    %17 = arith.addf %16, %15 : vector<1x16xf32>
    %18 = arith.divf %16, %17 : vector<1x16xf32>
    %19 = vector.shape_cast %18 : vector<1x16xf32> to vector<1x16x1xf32>
    %20 = vector.broadcast %19 : vector<1x16x1xf32> to vector<1x16x256xf32>
    %21 = arith.mulf %0, %20 : vector<1x16x256xf32>
    %c0_15 = arith.constant 0 : index
    %c0_16 = arith.constant 0 : index
    %c0_17 = arith.constant 0 : index
    %22 = vector.load %arg6[%c0_15, %c0_16, %c0_17] : memref<1x16x256xf32, #tpu.memory_space<vmem>>, vector<1x16x256xf32>
    tpu.vector_store %arg6[%c0_15, %c0_16, %c0_17], %21 {strides = array<i32>} : memref<1x16x256xf32, #tpu.memory_space<vmem>>, vector<1x16x256xf32>,
    return
  }
  func.func @transform_0(%arg0: i32) -> (i32, i32, i32) {
    %c0_i32 = arith.constant 0 : i32
    %c0_i32_0 = arith.constant 0 : i32
    %c0_i32_1 = arith.constant 0 : i32
    return %arg0, %c0_i32, %c0_i32_0 : i32, i32, i32
  }
  func.func @transform_1(%arg0: i32) -> (i32, i32) {
    %c0_i32 = arith.constant 0 : i32
    %c0_i32_0 = arith.constant 0 : i32
    %c0_i32_1 = arith.constant 0 : i32
    return %c0_i32, %c0_i32_0 : i32, i32
  }
  func.func @transform_2(%arg0: i32) -> (i32, i32) {
    %c0_i32 = arith.constant 0 : i32
    %c0_i32_0 = arith.constant 0 : i32
    %c0_i32_1 = arith.constant 0 : i32
    return %c0_i32, %c0_i32_0 : i32, i32
  }
  func.func @transform_3(%arg0: i32) -> (i32, i32) {
    %c0_i32 = arith.constant 0 : i32
    %c0_i32_0 = arith.constant 0 : i32
    %c0_i32_1 = arith.constant 0 : i32
    return %c0_i32, %c0_i32_0 : i32, i32
  }
  func.func @transform_4(%arg0: i32) -> (i32, i32) {
    %c0_i32 = arith.constant 0 : i32
    %c0_i32_0 = arith.constant 0 : i32
    %c0_i32_1 = arith.constant 0 : i32
    return %c0_i32, %c0_i32_0 : i32, i32
  }
  func.func @transform_5(%arg0: i32) -> (i32, i32, i32) {
    %c0_i32 = arith.constant 0 : i32
    %c0_i32_0 = arith.constant 0 : i32
    %c0_i32_1 = arith.constant 0 : i32
    return %arg0, %c0_i32, %c0_i32_0 : i32, i32, i32
  }
}

</mosaic_0001>

<llo_original>
// kernel: se_module.1
$region0: #{se_module.1}
  #allocation0 [shape = 'u32[]', space=smem, size = 0x4, offset = 0x4, fixed_abs, tag = 'smem constant byte address 0x4 - core index']
  #allocation1 [shape = 'u32[72,128]{1,0:T(1,128)}', space=vmem, size = 0x9000, scoped, tag = 'internal scratch']
  %s0 = inlined_call_operand.vmem [shape: f32[2,16,256], index: 0, kind: input, shape index: {}]
  %s1 = inlined_call_operand.vmem [shape: f32[16,4], index: 1, kind: input, shape index: {}]
  %s2 = inlined_call_operand.vmem [shape: f32[1,4], index: 2, kind: input, shape index: {}]
  %s3 = inlined_call_operand.vmem [shape: f32[4,16], index: 3, kind: input, shape index: {}]
  %s4 = inlined_call_operand.vmem [shape: f32[1,16], index: 4, kind: input, shape index: {}]
  %s5 = inlined_call_operand.vmem [shape: f32[2,16,256], index: 5, kind: output, shape index: {}]
  %s6 = sld [smem:[#allocation0]]
  $region53: #{se_module.1} parent=0
    _
  %s8 = ssub.s32 1, %s6
  %s9 = scalar_select 0, %s8, %s6
  loop: start=0, step=1, limit=4
  $region2: #{se_module.1} parent=0 // loop_pre_header
    _
  $region3: #{se_module.1} parent=0 // loop_header
    %s11 = sphi 0, %s15
    %p12 = scmp.ge.s32.totalorder %s11, 4
    %s21 = sphi 0, %s23
    %s24 = sphi 0, %s21
    %s25 = sphi 0, %s24
    %s41 = sphi 0, %s25
    %s45 = sphi 0, %s45
    %s47 = sphi 0, %s45
    %s48 = sphi 0, %s47
    %s62 = sphi 0, %s48
    %s66 = sphi 0, %s66
    %s68 = sphi 0, %s66
    %s69 = sphi 0, %s68
    %s83 = sphi 0, %s69
    %s87 = sphi 0, %s87
    %s89 = sphi 0, %s87
    %s90 = sphi 0, %s89
    %s104 = sphi 0, %s90
    %s108 = sphi 0, %s108
    %s110 = sphi 0, %s108
    %s111 = sphi 0, %s110
    %s125 = sphi 0, %s111
    %s131 = sphi 0, %s133
    %s134 = sphi 0, %s131
    %s135 = sphi 0, %s134
    %s151 = sphi 0, %s135
  $region4: #{se_module.1} parent=0 // loop_header_branch
    %14 = sbr.rel (%p12) target = $region8
  $region5: #{se_module.1} parent=0 // loop_body
    %s16 = ssub.s32 %s11, 1
    %s17 = ssub.s32 %s11, 2
    %s18 = sadd.s32 %s11, 1
    %s19 = ssub.s32 %s11, %s18
    %p20 = scmp.eq.s32.totalorder %s19, 0
    %s22 = sadd.s32 %s21, 1
    %s23 = scalar_select %p20, %s21, %s22
    %p26 = pneg %p20
    %p27 = scmp.eq.s32.totalorder %s11, 1
    %p28 = por %p26, %p27
    %p29 = scmp.ne.s32.totalorder %s21, %s24
    %p30 = scmp.eq.s32.totalorder %s11, 0
    %p31 = por %p29, %p30
    %p32 = scmp.ne.s32.totalorder %s21, %s24
    %p33 = scmp.eq.s32.totalorder %s16, 1
    %p34 = por %p32, %p33
    %p35 = scmp.ne.s32.totalorder %s24, %s25
    %p36 = scmp.eq.s32.totalorder %s16, 0
    %p37 = por %p35, %p36
    %p38 = scmp.ne.s32.totalorder %s24, %s25
    %p39 = scmp.eq.s32.totalorder %s17, 1
    %p40 = por %p38, %p39
    %p42 = scmp.ne.s32.totalorder %s25, %s41
    %p43 = scmp.eq.s32.totalorder %s17, 0
    %p44 = por %p42, %p43
    %s46 = sadd.s32 %s45, 1
    %p49 = scmp.eq.s32.totalorder %s11, 1
    %p50 = scmp.ne.s32.totalorder %s45, %s47
    %p51 = scmp.eq.s32.totalorder %s11, 0
    %p52 = por %p50, %p51
    %p53 = scmp.ne.s32.totalorder %s45, %s47
    %p54 = scmp.eq.s32.totalorder %s16, 1
    %p55 = por %p53, %p54
    %p56 = scmp.ne.s32.totalorder %s47, %s48
    %p57 = scmp.eq.s32.totalorder %s16, 0
    %p58 = por %p56, %p57
    %p59 = scmp.ne.s32.totalorder %s47, %s48
    %p60 = scmp.eq.s32.totalorder %s17, 1
    %p61 = por %p59, %p60
    %p63 = scmp.ne.s32.totalorder %s48, %s62
    %p64 = scmp.eq.s32.totalorder %s17, 0
    %p65 = por %p63, %p64
    %s67 = sadd.s32 %s66, 1
    %p70 = scmp.eq.s32.totalorder %s11, 1
    %p71 = scmp.ne.s32.totalorder %s66, %s68
    %p72 = scmp.eq.s32.totalorder %s11, 0
    %p73 = por %p71, %p72
    %p74 = scmp.ne.s32.totalorder %s66, %s68
    %p75 = scmp.eq.s32.totalorder %s16, 1
    %p76 = por %p74, %p75
    %p77 = scmp.ne.s32.totalorder %s68, %s69
    %p78 = scmp.eq.s32.totalorder %s16, 0
    %p79 = por %p77, %p78
    %p80 = scmp.ne.s32.totalorder %s68, %s69
    %p81 = scmp.eq.s32.totalorder %s17, 1
    %p82 = por %p80, %p81
    %p84 = scmp.ne.s32.totalorder %s69, %s83
    %p85 = scmp.eq.s32.totalorder %s17, 0
    %p86 = por %p84, %p85
    %s88 = sadd.s32 %s87, 1
    %p91 = scmp.eq.s32.totalorder %s11, 1
    %p92 = scmp.ne.s32.totalorder %s87, %s89
    %p93 = scmp.eq.s32.totalorder %s11, 0
    %p94 = por %p92, %p93
    %p95 = scmp.ne.s32.totalorder %s87, %s89
    %p96 = scmp.eq.s32.totalorder %s16, 1
    %p97 = por %p95, %p96
    %p98 = scmp.ne.s32.totalorder %s89, %s90
    %p99 = scmp.eq.s32.totalorder %s16, 0
    %p100 = por %p98, %p99
    %p101 = scmp.ne.s32.totalorder %s89, %s90
    %p102 = scmp.eq.s32.totalorder %s17, 1
    %p103 = por %p101, %p102
    %p105 = scmp.ne.s32.totalorder %s90, %s104
    %p106 = scmp.eq.s32.totalorder %s17, 0
    %p107 = por %p105, %p106
    %s109 = sadd.s32 %s108, 1
    %p112 = scmp.eq.s32.totalorder %s11, 1
    %p113 = scmp.ne.s32.totalorder %s108, %s110
    %p114 = scmp.eq.s32.totalorder %s11, 0
    %p115 = por %p113, %p114
    %p116 = scmp.ne.s32.totalorder %s108, %s110
    %p117 = scmp.eq.s32.totalorder %s16, 1
    %p118 = por %p116, %p117
    %p119 = scmp.ne.s32.totalorder %s110, %s111
    %p120 = scmp.eq.s32.totalorder %s16, 0
    %p121 = por %p119, %p120
    %p122 = scmp.ne.s32.totalorder %s110, %s111
    %p123 = scmp.eq.s32.totalorder %s17, 1
    %p124 = por %p122, %p123
    %p126 = scmp.ne.s32.totalorder %s111, %s125
    %p127 = scmp.eq.s32.totalorder %s17, 0
    %p128 = por %p126, %p127
    %s129 = ssub.s32 %s11, %s18
    %p130 = scmp.eq.s32.totalorder %s129, 0
    %s132 = sadd.s32 %s131, 1
    %s133 = scalar_select %p130, %s131, %s132
    %p136 = pneg %p130
    %p137 = scmp.eq.s32.totalorder %s11, 1
    %p138 = por %p136, %p137
    %p139 = scmp.ne.s32.totalorder %s131, %s134
    %p140 = scmp.eq.s32.totalorder %s11, 0
    %p141 = por %p139, %p140
    %p142 = scmp.ne.s32.totalorder %s131, %s134
    %p143 = scmp.eq.s32.totalorder %s16, 1
    %p144 = por %p142, %p143
    %p145 = scmp.ne.s32.totalorder %s134, %s135
    %p146 = scmp.eq.s32.totalorder %s16, 0
    %p147 = por %p145, %p146
    %p148 = scmp.ne.s32.totalorder %s134, %s135
    %p149 = scmp.eq.s32.totalorder %s17, 1
    %p150 = por %p148, %p149
    %p152 = scmp.ne.s32.totalorder %s135, %s151
    %p153 = scmp.eq.s32.totalorder %s17, 0
    %p154 = por %p152, %p153
    %p155 = scmp.le.s32.totalorder 1, %s11
    %p156 = scmp.lt.s32.totalorder %s11, 3
    %p157 = pnand %p155, %p156
    %p158 = pneg %p157
    // Predicated region
    $region9: #{se_module.1} parent=5 // pred_check
      _
    $region10: #{se_module.1} parent=5 // pred_check_branch
      %160 = sbr.rel (%p157) target = $region12
    $region11: #{se_module.1} parent=5 // pred_region
      %s161 = ssub.s32 %s11, 1
      // Predicated region
      $region13: #{se_module.1} parent=11 // pred_check
        %p162 = pneg %p58
      $region14: #{se_module.1} parent=11 // pred_check_branch
        %164 = sbr.rel (%p162) target = $region16
      $region15: #{se_module.1} parent=11 // pred_region
        _
      $region16: #{se_module.1} parent=11 // pred_fallthru
        _
      // Predicated region
      $region17: #{se_module.1} parent=11 // pred_check
        %p165 = pneg %p79
      $region18: #{se_module.1} parent=11 // pred_check_branch
        %167 = sbr.rel (%p165) target = $region20
      $region19: #{se_module.1} parent=11 // pred_region
        _
      $region20: #{se_module.1} parent=11 // pred_fallthru
        _
      // Predicated region
      $region21: #{se_module.1} parent=11 // pred_check
        %p168 = pneg %p100
      $region22: #{se_module.1} parent=11 // pred_check_branch
        %170 = sbr.rel (%p168) target = $region24
      $region23: #{se_module.1} parent=11 // pred_region
        _
      $region24: #{se_module.1} parent=11 // pred_fallthru
        _
      // Predicated region
      $region25: #{se_module.1} parent=11 // pred_check
        %p171 = pneg %p121
      $region26: #{se_module.1} parent=11 // pred_check_branch
        %173 = sbr.rel (%p171) target = $region28
      $region27: #{se_module.1} parent=11 // pred_region
        _
      $region28: #{se_module.1} parent=11 // pred_fallthru
        _
    $region12: #{se_module.1} parent=5 // pred_fallthru
      _
    %p174 = scmp.lt.s32.totalorder %s11, 2
    // Predicated region
    $region29: #{se_module.1} parent=5 // pred_check
      %p175 = pneg %p174
    $region30: #{se_module.1} parent=5 // pred_check_branch
      %177 = sbr.rel (%p175) target = $region32
    $region31: #{se_module.1} parent=5 // pred_region
      // Predicated region
      $region33: #{se_module.1} parent=31 // pred_check
        %p178 = pneg %p31
      $region34: #{se_module.1} parent=31 // pred_check_branch
        %180 = sbr.rel (%p178) target = $region36
      $region35: #{se_module.1} parent=31 // pred_region
        %p181 = scmp.lt.s32.totalorder %s11, 1
        %s182 = scalar_select %p181, %s11, 1
        %s183 = smul.addr %s182, 4
        %s184 = smul.addr %s183, 8
        %s185 = scalar_lea.vmem %s0, %s184
      $region36: #{se_module.1} parent=31 // pred_fallthru
        _
    $region32: #{se_module.1} parent=5 // pred_fallthru
      _
    %p186 = scmp.le.s32.totalorder 1, %s11
    %p187 = scmp.lt.s32.totalorder %s11, 3
    %p188 = pnand %p186, %p187
    %p189 = pneg %p188
    // Predicated region
    $region37: #{se_module.1} parent=5 // pred_check
      _
    $region38: #{se_module.1} parent=5 // pred_check_branch
      %191 = sbr.rel (%p188) target = $region40
    $region39: #{se_module.1} parent=5 // pred_region
      %s192 = ssub.s32 %s11, 1
      %p193 = scmp.lt.s32.totalorder %s16, 1
      %s194 = scalar_select %p193, %s16, 1
      %s195 = smul.addr %s194, 4
      %s196 = smul.addr %s195, 8
      %s197 = scalar_lea.vmem %s0, %s196
      %p198 = pneg %p37
      %p199 = pneg %p34
      %p200 = pneg %p58
      %p201 = pneg %p55
      %p202 = pneg %p79
      %p203 = pneg %p76
      %p204 = pneg %p100
      %p205 = pneg %p97
      %p206 = pneg %p121
      %p207 = pneg %p118
      %p208 = pneg %p147
      %p209 = pneg %p144
      %p210 = scmp.lt.s32.totalorder %s16, 1
      %s211 = scalar_select %p210, %s16, 1
      %s212 = smul.addr %s211, 4
      %s213 = smul.addr %s212, 8
      %s214 = scalar_lea.vmem %s5, %s213
      %p215 = scmp.lt.s32.totalorder %s16, 1
      %s216 = scalar_select %p215, %s16, 1
      %s217 = smul.addr %s216, 4
      %s218 = smul.addr %s217, 8
      %s219 = scalar_lea.vmem %s0, %s218
      %p220 = scmp.lt.s32.totalorder %s16, 1
      %s221 = scalar_select %p220, %s16, 1
      %s222 = smul.addr %s221, 4
      %s223 = smul.addr %s222, 8
      %s224 = scalar_lea.vmem %s5, %s223
      %v225 = vld [vmem:[%s219] sm:$0xff]
      %v226 = vld [vmem:[%s219 + $0x8] sm:$0xff]
      %v227 = vld [vmem:[%s219 + $0x10] sm:$0xff]
      %v228 = vld [vmem:[%s219 + $0x18] sm:$0xff]
      %v229 = vadd.f32 %v225, %v226
      %230 = vadd.xlane.f32.xlu0 %v229
      %v231 = vpop.xlane.xlu0 %230
      %v232 = vadd.f32 %v227, %v228
      %233 = vadd.xlane.f32.xlu0 %v232
      %v234 = vpop.xlane.xlu0 %233
      %v235 = vmul.f32 %v231, 0.00390625
      %v236 = vmul.f32 %v234, 0.00390625
      %v237 = vld [vmem:[%s1] sm:$0xff]
      %v238 = vld [vmem:[%s1 + $0x8] sm:$0xff]
      %v239 = vld [vmem:[%s2] sm:$0x1]
      %v242 = vlaneseq
      %v243 = vand.u32 %v242, 127
      %v244 = vperm.slane %v235, %v243
      %v245 = vadd.s32 %v243, 4294967288
      %v246 = vperm.slane %v236, %v245
      %vm247 = vcmask 130112
      %v248 = vsel %vm247, %v246, %v244
      %vm249 = vcmask 130048
      %v250 = vsel %vm249, %v248, 0
      %252 = vmatpush.msra.mxu0 0.0
      %253 = vmatpush.msra.mxu0 0.0
      %254 = vmatpush.msra.mxu0 0.0
      %255 = vmatpush.msra.mxu0 0.0
      %256 = vmatpush.msra.mxu0 0.0
      %257 = vmatpush.msra.mxu0 0.0
      %258 = vmatpush.msra.mxu0 0.0
      %259 = vmatpush.msra.mxu0 0.0
      %260 = vmatpush.msra.mxu0 0.0
      %261 = vmatpush.msra.mxu0 0.0
      %262 = vmatpush.msra.mxu0 0.0
      %263 = vmatpush.msra.mxu0 0.0
      %264 = vmatpush.msra.mxu0 0.0
      %265 = vmatpush.msra.mxu0 0.0
      %266 = vmatpush.msra.mxu0 %v238
      %267 = vmatpush.msra.mxu0 %v237
      %268 = vmatmul.f32.gmra.mxu0 %v250
      %v269 = vpop.f32.mrf.mxu0
      %v270 = vadd.f32 %v239, %v269
      %271 = vdwg.mxu0
      %v272 = vmax.f32 %v270, 0.0
      %v273 = vld [vmem:[%s3] sm:$0xf]
      %v274 = vld [vmem:[%s4] sm:$0x1]
      %vm275 = vcmask 31744
      %v277 = vsel %vm275, %v272, 0
      %vm279 = vcmask 1043456
      %v281 = vsel %vm279, %v273, 0
      %283 = vmatpush.msra.mxu0 0.0
      %284 = vmatpush.msra.mxu0 0.0
      %285 = vmatpush.msra.mxu0 0.0
      %286 = vmatpush.msra.mxu0 0.0
      %287 = vmatpush.msra.mxu0 0.0
      %288 = vmatpush.msra.mxu0 0.0
      %289 = vmatpush.msra.mxu0 0.0
      %290 = vmatpush.msra.mxu0 0.0
      %291 = vmatpush.msra.mxu0 0.0
      %292 = vmatpush.msra.mxu0 0.0
      %293 = vmatpush.msra.mxu0 0.0
      %294 = vmatpush.msra.mxu0 0.0
      %295 = vmatpush.msra.mxu0 0.0
      %296 = vmatpush.msra.mxu0 0.0
      %297 = vmatpush.msra.mxu0 0.0
      %298 = vmatpush.msra.mxu0 %v281
      %299 = vmatmul.f32.gmra.mxu0 %v277
      %v300 = vpop.f32.mrf.mxu0
      %v301 = vadd.f32 %v274, %v300
      %302 = vdwg.mxu0
      %v303 = vxor.u32 %v301, 2147483648
      %v304 = vmul.f32 %v303, 1.442695
      %v305 = vpow.pop %v304
      %v306 = vadd.f32 %v305, 1.0
      %v307 = vrcp.pop %v306
      %v308 = vmul.f32 %v306, %v307
      %v309 = vsub.f32 1.0, %v308
      %v310 = vmul.f32 %v307, %v309
      %v311 = vadd.f32 %v307, %v310
      %vm312 = vweird.f32 %v306
      %vm313 = vweird.f32 %v307
      %vm314 = vmor %vm312, %vm313
      %v315 = vsel %vm314, %v307, %v311
      %v316 = vand.u32 2147483647, %v306
      %vm317 = vcmp.eq.f32.partialorder %v316, 8.507059e+37
      %v318 = vand.u32 %v306, 2147483648
      %v319 = vor.u32 1.1754944e-38, %v318
      %v320 = vsel %vm317, %v319, %v315
      %v321 = vmul.f32 1.0, %v320
      %v322 = vperm.slane %v321, 0
      %v323 = vlaneseq
      %v324 = vshrl.u32 %v323, 7
      %326 = vset.pattern.permute.xlu0 %v324
      %327 = vperm.xlu0 %326, %v322
      %v328 = vpop.permute.xlu0 %327
      %v329 = vlaneseq
      %v330 = vshrl.u32 %v329, 7
      %v331 = vadd.s32 %v330, 8
      %332 = vset.pattern.permute.xlu0 %v331
      %333 = vperm.xlu0 %332, %v322
      %v334 = vpop.permute.xlu0 %333
      %v335 = vmul.f32 %v225, %v328
      %v336 = vmul.f32 %v226, %v328
      %v337 = vmul.f32 %v227, %v334
      %v338 = vmul.f32 %v228, %v334
      %339 = vst [vmem:[%s224] sm:$0xff] %v335
      %340 = vst [vmem:[%s224 + $0x8] sm:$0xff] %v336
      %341 = vst [vmem:[%s224 + $0x10] sm:$0xff] %v337
      %342 = vst [vmem:[%s224 + $0x18] sm:$0xff] %v338
      %p343 = scmp.lt.s32.totalorder %s16, 1
      %s344 = scalar_select %p343, %s16, 1
      %s345 = smul.addr %s344, 4
      %s346 = smul.addr %s345, 8
      %s347 = scalar_lea.vmem %s5, %s346
      // Predicated region
      $region41: #{se_module.1} parent=39 // pred_check
        %p348 = pneg %p144
      $region42: #{se_module.1} parent=39 // pred_check_branch
        %350 = sbr.rel (%p348) target = $region44
      $region43: #{se_module.1} parent=39 // pred_region
        _
      $region44: #{se_module.1} parent=39 // pred_fallthru
        _
    $region40: #{se_module.1} parent=5 // pred_fallthru
      _
    %p351 = scmp.le.s32.totalorder 2, %s11
    // Predicated region
    $region45: #{se_module.1} parent=5 // pred_check
      %p352 = pneg %p351
    $region46: #{se_module.1} parent=5 // pred_check_branch
      %354 = sbr.rel (%p352) target = $region48
    $region47: #{se_module.1} parent=5 // pred_region
      %s355 = ssub.s32 %s11, 2
      // Predicated region
      $region49: #{se_module.1} parent=47 // pred_check
        %p356 = pneg %p150
      $region50: #{se_module.1} parent=47 // pred_check_branch
        %358 = sbr.rel (%p356) target = $region52
      $region51: #{se_module.1} parent=47 // pred_region
        %p359 = scmp.lt.s32.totalorder %s17, 1
        %s360 = scalar_select %p359, %s17, 1
        %s361 = smul.addr %s360, 4
        %s362 = smul.addr %s361, 8
        %s363 = scalar_lea.vmem %s5, %s362
      $region52: #{se_module.1} parent=47 // pred_fallthru
        _
    $region48: #{se_module.1} parent=5 // pred_fallthru
      _
  $region6: #{se_module.1} parent=0 // loop_footer
    %s15 = sadd.s32 1, %s11
  $region7: #{se_module.1} parent=0 // loop_footer_branch
    %10 = sbr.rel target = $region3
  $region8: #{se_module.1} parent=0 // loop_exit
    _

</llo_original>
